<compile_context>
chip_gen: v7x
topology: tpu7x:2x2x1
jax: 0.10.0
libtpu: 0.0.40
codegen_flags: <defaults>
</compile_context>

<pallas_src>
import functools
import math

import jax
import jax.numpy as jnp
import numpy as np
from jax.experimental import pallas as pl
from jax.experimental.pallas import tpu as pltpu


# --------------------------------------------------------------------------
# RoPE tables (identical construction/pairing to _RoPECache.get + _apply_rope)
# --------------------------------------------------------------------------
def rope_tables(seq_len: int, dim: int, dtype=jnp.float32):
    inv_freq = 1.0 / (10000.0 ** (jnp.arange(0, dim, 2, dtype=dtype) / dim))
    t = jnp.arange(seq_len, dtype=dtype)
    freqs = jnp.einsum("l,d->ld", t, inv_freq)            # [L, dim/2]
    sin = jnp.repeat(jnp.sin(freqs), 2, axis=-1)          # repeat_interleave(2)
    cos = jnp.repeat(jnp.cos(freqs), 2, axis=-1)
    return sin, cos


def apply_rope(x, sin, cos):
    """_apply_rope with _rotate_half: (x1, x2) -> (-x2, x1)."""
    d = x.shape[-1]
    x1, x2 = x[..., : d // 2], x[..., d // 2:]
    rot = jnp.concatenate([-x2, x1], axis=-1)
    return x * cos + rot * sin


# --------------------------------------------------------------------------
# Pallas kernel: one (batch, head-group) per grid step; all heads of the
# group processed with batched / row-stacked wide MXU passes.
# --------------------------------------------------------------------------
def mla_kernel(q_ref,     # [hg, S, K]   per-batch, per-group queries (after q_proj)
               wabs_ref,  # [hg, K, d_c] absorbed query weight: w_kc_q @ W_qr @ W_kr^T
               wkvT_ref,  # [hg, d_c, K] w_kc_kv^T per head
               kv_ref,    # [L, d_c]     RoPE'd compressed K/V for this batch (shared)
               o_ref,     # [hg, S, K]   latent context per head
               *, mxu_dtype):
    hg, S, K = q_ref.shape
    L, d_c = kv_ref.shape

    kv = kv_ref[...]                                       # [L, d_c] f32
    kv_mxu = kv.astype(mxu_dtype)

    # (1) Absorbed query projection: ONE batched MXU pass over the head group.
    q_c = jnp.einsum("hsk,hkd->hsd",
                     q_ref[...].astype(mxu_dtype),
                     wabs_ref[...].astype(mxu_dtype),
                     preferred_element_type=jnp.float32)   # [hg, S, d_c]

    # (2) Scores for every head of the group in ONE wide matmul against the
    #     shared kv: stack heads along rows (M = hg*S). Leading-dim merge is
    #     layout-free when S is a multiple of 8.
    q_c_flat = q_c.reshape(hg * S, d_c)
    scores = jnp.einsum("nd,ld->nl",
                        q_c_flat.astype(mxu_dtype), kv_mxu,
                        preferred_element_type=jnp.float32)  # [hg*S, L]

    # Softmax over keys — f32 elementwise throughout (VPU/EUP), EXACT divide
    # for the normalization (the approx reciprocal was the v2 failure).
    m = jnp.max(scores, axis=-1, keepdims=True)
    e = jnp.exp(scores - m)
    denom = jnp.sum(e, axis=-1, keepdims=True)
    attn = e / denom                                        # [hg*S, L]

    # (3) attn @ V batched across heads: one wide matmul, shared kv RHS.
    ctx_c = jnp.dot(attn.astype(mxu_dtype), kv_mxu,
                    preferred_element_type=jnp.float32)     # [hg*S, d_c]

    # (4) Per-head output projection, batched; direct store, no concatenate.
    ctx_c = ctx_c.reshape(hg, S, d_c)
    ctx_lat = jnp.einsum("hsd,hdk->hsk",
                         ctx_c.astype(mxu_dtype),
                         wkvT_ref[...].astype(mxu_dtype),
                         preferred_element_type=jnp.float32)  # [hg, S, K]
    o_ref[...] = ctx_lat.astype(o_ref.dtype)


# --------------------------------------------------------------------------
# Wrapper
# --------------------------------------------------------------------------
def mla_forward(hidden_q, kv_c, params, *, head_group=None,
                mxu_dtype=jnp.float32):
    B, S, dim_q = hidden_q.shape
    _, L, d_c = kv_c.shape
    H, K, d_cq = params["w_kc_q"].shape

    if head_group is None:
        head_group = H // 2 if (H >= 2 and H % 2 == 0) else H
    assert H % head_group == 0
    G = H // head_group

    # q_proj fused with the head split: produce [B, H, S, K] directly from one
    # XLA matmul (no separate relayout pass).
    q_bhsk = jnp.einsum("bsd,hkd->bhsk", hidden_q,
                        params["q_proj_w"].reshape(H, K, dim_q))

    # RoPE hoisted out of the kernel: computed once per batch element in JAX.
    sin, cos = rope_tables(L, d_c, kv_c.dtype)
    kv_rope = apply_rope(kv_c, sin[None], cos[None])              # [B, L, d_c]

    # Absorb W_kr into the query-side weight (exact by associativity):
    #   W_abs[h] = w_kc_q[h] @ W_qr[h] @ W_kr[h]^T   in [K, d_c]
    # The 1/sqrt(r) factor lives inside W_qr (module init); whatever scale a
    # loaded checkpoint carries in W_qr is preserved by the fusion.
    w_abs = jnp.einsum("hkq,hqr,hdr->hkd",
                       params["w_kc_q"], params["W_qr"], params["W_kr"])
    w_kc_kv_T = jnp.transpose(params["w_kc_kv"], (0, 2, 1))       # [H, d_c, K]

    # VMEM budget from the real tile sizes (double-buffered blocks +
    # in-kernel intermediates), never below the default scoped limit.
    itemsize = 4
    tile_bytes = itemsize * (
        2 * (head_group * S * K)                 # q block
        + 2 * (L * d_c)                          # kv block
        + 2 * (head_group * K * d_c)             # w_abs block
        + 2 * (head_group * d_c * K)             # w_kc_kv^T block
        + 2 * (head_group * S * K)               # out block
        + head_group * S * (2 * d_c + 2 * L + K) # q_c, scores, attn, ctx, out
    )
    vmem_limit = int(min(max(4 * tile_bytes, 32 << 20), 64 << 20))

    # Advisory cost hint for the XLA scheduler around the custom call.
    flops = 2 * B * H * S * d_c * (K + 2 * L + K)
    bytes_accessed = itemsize * (2 * B * H * S * K + B * L * d_c
                                 + 2 * H * K * d_c)
    cost = pl.CostEstimate(flops=flops, transcendentals=B * H * S * L,
                           bytes_accessed=bytes_accessed)

    kernel = functools.partial(mla_kernel, mxu_dtype=mxu_dtype)

    ctx = pl.pallas_call(
        kernel,
        out_shape=jax.ShapeDtypeStruct((B, H, S, K), jnp.float32),
        grid_spec=pltpu.PrefetchScalarGridSpec(
            num_scalar_prefetch=0,
            grid=(B, G),
            in_specs=[
                pl.BlockSpec((None, head_group, S, K), lambda b, g: (b, g, 0, 0)),
                pl.BlockSpec((head_group, K, d_c),     lambda b, g: (g, 0, 0)),
                pl.BlockSpec((head_group, d_c, K),     lambda b, g: (g, 0, 0)),
                # kv index map depends only on b -> fetched once per batch,
                # reused across all head groups.
                pl.BlockSpec((None, L, d_c),           lambda b, g: (b, 0, 0)),
            ],
            out_specs=pl.BlockSpec((None, head_group, S, K),
                                   lambda b, g: (b, g, 0, 0)),
        ),
        compiler_params=pltpu.CompilerParams(
            dimension_semantics=("parallel", "parallel"),
            vmem_limit_bytes=vmem_limit),
        cost_estimate=cost,
    )(q_bhsk, w_abs, w_kc_kv_T, kv_rope)

    # ctx: [B, H, S, K]. out_proj over the flattened (H, K) axis — the
    # permute/reshape of the reference is folded into the einsum (no explicit
    # relayout materialized).
    out_w = params["out_proj_w"].reshape(dim_q, H, K)
    return jnp.einsum("bhsk,qhk->bsq", ctx, out_w)


# --------------------------------------------------------------------------
# Pure-JAX reference (mirrors the PyTorch forward, fallback attention path)
# --------------------------------------------------------------------------
def mla_reference(hidden_q, kv_c, params):
    B, S, _ = hidden_q.shape
    _, L, d_c = kv_c.shape
    H, K, _ = params["w_kc_q"].shape

    q_hk = jnp.dot(hidden_q, params["q_proj_w"].T).reshape(B, S, H, K)
    q_big = jnp.einsum("bshk,hkq->bshq", q_hk, params["w_kc_q"])

    sin, cos = rope_tables(L, d_c, kv_c.dtype)
    kv_rope = apply_rope(kv_c, sin[None], cos[None])

    q_r = jnp.einsum("bshq,hqr->bshr", q_big, params["W_qr"]).transpose(0, 2, 1, 3)
    k_r = jnp.einsum("bld,hdr->bhlr", kv_rope, params["W_kr"])
    v_c = jnp.broadcast_to(kv_rope[:, None], (B, H, L, d_c))

    scores = jnp.einsum("bhsr,bhlr->bhsl", q_r, k_r)
    attn = jax.nn.softmax(scores, axis=-1)
    ctx_c = jnp.einsum("bhsl,bhld->bhsd", attn, v_c)

    w_kc_kv_T = jnp.transpose(params["w_kc_kv"], (0, 2, 1))
    ctx_lat = jnp.einsum("bhsd,hdK->bhsK", ctx_c, w_kc_kv_T)
    ctx_lat = ctx_lat.transpose(0, 2, 1, 3).reshape(B, S, H * K)
    return jnp.dot(ctx_lat, params["out_proj_w"].T)


# --------------------------------------------------------------------------
# Deterministic parameter init (shapes from __init__; kaiming-style uniform)
# --------------------------------------------------------------------------
def init_params(key, dim_q, H, K, d_c, d_cq, r):
    ks = jax.random.split(key, 6)

    def unif(k, shape, fan_in):
        bound = 1.0 / math.sqrt(fan_in)
        return jax.random.uniform(k, shape, jnp.float32, -bound, bound)

    params = {
        "q_proj_w":   unif(ks[0], (H * K, dim_q), dim_q),
        "w_kc_q":     unif(ks[1], (H, K, d_cq), K),
        "w_kc_kv":    unif(ks[2], (H, K, d_c), K),
        "W_qr":       unif(ks[3], (H, d_cq, r), d_cq) / math.sqrt(r),
        "W_kr":       unif(ks[4], (H, d_c, r), d_c),
        "out_proj_w": unif(ks[5], (dim_q, H * K), H * K),
    }
    return params


if __name__ == "__main__":
    # Small shapes consistent with the module's forward
    B, S, L = 2, 8, 8
    dim_q, H, K = 32, 4, 16
    d_c, d_cq, r = 32, 48, 16

    key = jax.random.PRNGKey(0)
    k_h, k_kv, k_p = jax.random.split(key, 3)
    hidden_q = jax.random.normal(k_h, (B, S, dim_q), jnp.float32)
    kv_c = jax.random.normal(k_kv, (B, L, d_c), jnp.float32)
    params = init_params(k_p, dim_q, H, K, d_c, d_cq, r)

    out = jax.jit(mla_forward)(hidden_q, kv_c, params)
    out = jax.block_until_ready(out)

    ref = mla_reference(hidden_q, kv_c, params)
    # Exact softmax normalization now; residual deviation vs the reference is
    # only matmul re-association from the (exact-in-math) weight absorption.
    np.testing.assert_allclose(np.asarray(out), np.asarray(ref),
                               rtol=1e-3, atol=1e-5)
    assert out.shape == (B, S, dim_q)
    print("KERNEL_OK")
</pallas_src>

<mosaic_0001>
module attributes {stable_mosaic.version = 11 : i64} {
  func.func @mla_kernel(%arg0: i32, %arg1: i32, %arg2: memref<1x2x8x16xf32, #tpu.memory_space<vmem>>, %arg3: memref<2x16x32xf32, #tpu.memory_space<vmem>>, %arg4: memref<2x32x16xf32, #tpu.memory_space<vmem>>, %arg5: memref<1x8x32xf32, #tpu.memory_space<vmem>>, %arg6: memref<1x2x8x16xf32, #tpu.memory_space<vmem>>) attributes {dimension_semantics = [#tpu.dimension_semantics<parallel>, #tpu.dimension_semantics<parallel>], iteration_bounds = array<i64: 2, 2>, scalar_prefetch = 0 : i64, scratch_operands = 0 : i64, tpu.core_type = #tpu.core_type<tc>, window_params = [{transform_indices = @transform_0, window_bounds = array<i64: 1, 2, 8, 16>}, {transform_indices = @transform_1, window_bounds = array<i64: 2, 16, 32>}, {transform_indices = @transform_2, window_bounds = array<i64: 2, 32, 16>}, {transform_indices = @transform_3, window_bounds = array<i64: 1, 8, 32>}, {transform_indices = @transform_4, window_bounds = array<i64: 1, 2, 8, 16>}]} {
    %c0 = arith.constant 0 : index
    %c0_0 = arith.constant 0 : index
    %c0_1 = arith.constant 0 : index
    %0 = vector.load %arg5[%c0, %c0_0, %c0_1] : memref<1x8x32xf32, #tpu.memory_space<vmem>>, vector<1x8x32xf32>
    %1 = vector.shape_cast %0 : vector<1x8x32xf32> to vector<8x32xf32>
    %c0_2 = arith.constant 0 : index
    %c0_3 = arith.constant 0 : index
    %c0_4 = arith.constant 0 : index
    %c0_5 = arith.constant 0 : index
    %2 = vector.load %arg2[%c0_2, %c0_3, %c0_4, %c0_5] : memref<1x2x8x16xf32, #tpu.memory_space<vmem>>, vector<1x2x8x16xf32>
    %3 = vector.shape_cast %2 : vector<1x2x8x16xf32> to vector<2x8x16xf32>
    %c0_6 = arith.constant 0 : index
    %c0_7 = arith.constant 0 : index
    %c0_8 = arith.constant 0 : index
    %4 = vector.load %arg3[%c0_6, %c0_7, %c0_8] : memref<2x16x32xf32, #tpu.memory_space<vmem>>, vector<2x16x32xf32>
    "tpu.trace_start"() <{level = 10 : i32, message = "hsk,hkd->hsd"}> : () -> ()
    %cst = arith.constant dense<0.000000e+00> : vector<2x8x32xf32>
    %5 = tpu.matmul %3, %4, %cst {dimension_numbers = #tpu.dot_dimension_numbers<[2], [1], [1], [2], [0, 0, 0, 1, 1, 2], [0], [0]>} : vector<2x8x16xf32>, vector<2x16x32xf32>, vector<2x8x32xf32> -> vector<2x8x32xf32>
    "tpu.trace_stop"() : () -> ()
    %6 = vector.shape_cast %5 : vector<2x8x32xf32> to vector<16x32xf32>
    "tpu.trace_start"() <{level = 10 : i32, message = "nd,ld->nl"}> : () -> ()
    %cst_9 = arith.constant dense<0.000000e+00> : vector<16x8xf32>
    %7 = tpu.matmul %6, %1, %cst_9 {dimension_numbers = #tpu.dot_dimension_numbers<[1], [1], [0], [0], [0, 0, 1, 0], [], []>} : vector<16x32xf32>, vector<8x32xf32>, vector<16x8xf32> -> vector<16x8xf32>
    "tpu.trace_stop"() : () -> ()
    %cst_10 = arith.constant dense<0xFF800000> : vector<16xf32>
    %8 = vector.multi_reduction <maximumf>, %7, %cst_10 [1] : vector<16x8xf32> to vector<16xf32>
    %9 = vector.shape_cast %8 : vector<16xf32> to vector<16x1xf32>
    %10 = vector.broadcast %9 : vector<16x1xf32> to vector<16x8xf32>
    %11 = arith.subf %7, %10 : vector<16x8xf32>
    %12 = math.exp %11 : vector<16x8xf32>
    %cst_11 = arith.constant dense<0.000000e+00> : vector<16xf32>
    %13 = vector.multi_reduction <add>, %12, %cst_11 [1] : vector<16x8xf32> to vector<16xf32>
    %14 = vector.shape_cast %13 : vector<16xf32> to vector<16x1xf32>
    %15 = vector.broadcast %14 : vector<16x1xf32> to vector<16x8xf32>
    %16 = arith.divf %12, %15 : vector<16x8xf32>
    %cst_12 = arith.constant dense<0.000000e+00> : vector<16x32xf32>
    %17 = tpu.matmul %16, %1, %cst_12 {dimension_numbers = #tpu.dot_dimension_numbers<[1], [0], [0], [1], [0, 0, 1, 1], [], []>} : vector<16x8xf32>, vector<8x32xf32>, vector<16x32xf32> -> vector<16x32xf32>
    %18 = vector.shape_cast %17 : vector<16x32xf32> to vector<2x8x32xf32>
    %c0_13 = arith.constant 0 : index
    %c0_14 = arith.constant 0 : index
    %c0_15 = arith.constant 0 : index
    %19 = vector.load %arg4[%c0_13, %c0_14, %c0_15] : memref<2x32x16xf32, #tpu.memory_space<vmem>>, vector<2x32x16xf32>
    "tpu.trace_start"() <{level = 10 : i32, message = "hsd,hdk->hsk"}> : () -> ()
    %cst_16 = arith.constant dense<0.000000e+00> : vector<2x8x16xf32>
    %20 = tpu.matmul %18, %19, %cst_16 {dimension_numbers = #tpu.dot_dimension_numbers<[2], [1], [1], [2], [0, 0, 0, 1, 1, 2], [0], [0]>} : vector<2x8x32xf32>, vector<2x32x16xf32>, vector<2x8x16xf32> -> vector<2x8x16xf32>
    "tpu.trace_stop"() : () -> ()
    %c0_17 = arith.constant 0 : index
    %c0_18 = arith.constant 0 : index
    %c0_19 = arith.constant 0 : index
    %c0_20 = arith.constant 0 : index
    %21 = vector.load %arg6[%c0_17, %c0_18, %c0_19, %c0_20] : memref<1x2x8x16xf32, #tpu.memory_space<vmem>>, vector<1x2x8x16xf32>
    %22 = vector.shape_cast %21 : vector<1x2x8x16xf32> to vector<2x8x16xf32>
    %23 = vector.shape_cast %20 : vector<2x8x16xf32> to vector<1x2x8x16xf32>
    tpu.vector_store %arg6[%c0_17, %c0_18, %c0_19, %c0_20], %23 {strides = array<i32>} : memref<1x2x8x16xf32, #tpu.memory_space<vmem>>, vector<1x2x8x16xf32>,
    return
  }
  func.func @transform_0(%arg0: i32, %arg1: i32) -> (i32, i32, i32, i32) {
    %c0_i32 = arith.constant 0 : i32
    %c0_i32_0 = arith.constant 0 : i32
    %c0_i32_1 = arith.constant 0 : i32
    return %arg0, %arg1, %c0_i32, %c0_i32_0 : i32, i32, i32, i32
  }
  func.func @transform_1(%arg0: i32, %arg1: i32) -> (i32, i32, i32) {
    %c0_i32 = arith.constant 0 : i32
    %c0_i32_0 = arith.constant 0 : i32
    %c0_i32_1 = arith.constant 0 : i32
    return %arg1, %c0_i32, %c0_i32_0 : i32, i32, i32
  }
  func.func @transform_2(%arg0: i32, %arg1: i32) -> (i32, i32, i32) {
    %c0_i32 = arith.constant 0 : i32
    %c0_i32_0 = arith.constant 0 : i32
    %c0_i32_1 = arith.constant 0 : i32
    return %arg1, %c0_i32, %c0_i32_0 : i32, i32, i32
  }
  func.func @transform_3(%arg0: i32, %arg1: i32) -> (i32, i32, i32) {
    %c0_i32 = arith.constant 0 : i32
    %c0_i32_0 = arith.constant 0 : i32
    %c0_i32_1 = arith.constant 0 : i32
    return %arg0, %c0_i32, %c0_i32_0 : i32, i32, i32
  }
  func.func @transform_4(%arg0: i32, %arg1: i32) -> (i32, i32, i32, i32) {
    %c0_i32 = arith.constant 0 : i32
    %c0_i32_0 = arith.constant 0 : i32
    %c0_i32_1 = arith.constant 0 : i32
    return %arg0, %arg1, %c0_i32, %c0_i32_0 : i32, i32, i32, i32
  }
}

</mosaic_0001>

<llo_original>
// kernel: mla_forward.1
$region0: #{mla_forward.1}
  #allocation0 [shape = 'u32[]', space=smem, size = 0x4, offset = 0x4, fixed_abs, tag = 'smem constant byte address 0x4 - core index']
  #allocation1 [shape = 'u32[144,128]{1,0:T(1,128)}', space=vmem, size = 0x12000, scoped, tag = 'internal scratch']
  %s0 = inlined_call_operand.vmem [shape: f32[2,4,8,16], index: 0, kind: input, shape index: {}]
  %s1 = inlined_call_operand.vmem [shape: f32[4,16,32], index: 1, kind: input, shape index: {}]
  %s2 = inlined_call_operand.vmem [shape: f32[4,32,16], index: 2, kind: input, shape index: {}]
  %s3 = inlined_call_operand.vmem [shape: f32[2,8,32], index: 3, kind: input, shape index: {}]
  %s4 = inlined_call_operand.vmem [shape: f32[2,4,8,16], index: 4, kind: output, shape index: {}]
  %s5 = sld [smem:[#allocation0]]
  $region49: #{mla_forward.1} parent=0
    _
  %s7 = ssub.s32 1, %s5
  %s8 = scalar_select 0, %s7, %s5
  loop: start=0, step=1, limit=6
  $region2: #{mla_forward.1} parent=0 // loop_pre_header
    _
  $region3: #{mla_forward.1} parent=0 // loop_header
    %s10 = sphi 0, %s14
    %p11 = scmp.ge.s32.totalorder %s10, 6
    %s17 = sphi 0, %s29
    %s18 = sphi 0, %s25
    %s19 = sphi 0, %s17
    %s20 = sphi 0, %s18
    %s21 = sphi 0, %s19
    %s22 = sphi 0, %s20
    %s34 = sphi 0, %s36
    %s37 = sphi 0, %s34
    %s38 = sphi 0, %s37
    %s54 = sphi 0, %s38
    %s60 = sphi 0, %s62
    %s63 = sphi 0, %s60
    %s64 = sphi 0, %s63
    %s80 = sphi 0, %s64
    %s86 = sphi 0, %s88
    %s89 = sphi 0, %s86
    %s90 = sphi 0, %s89
    %s106 = sphi 0, %s90
    %s112 = sphi 0, %s114
    %s115 = sphi 0, %s112
    %s116 = sphi 0, %s115
    %s132 = sphi 0, %s116
    %s140 = sphi 0, %s142
    %s143 = sphi 0, %s140
    %s144 = sphi 0, %s143
    %s160 = sphi 0, %s144
  $region4: #{mla_forward.1} parent=0 // loop_header_branch
    %13 = sbr.rel (%p11) target = $region8
  $region5: #{mla_forward.1} parent=0 // loop_body
    %s15 = ssub.s32 %s10, 1
    %s16 = ssub.s32 %s10, 2
    %s23 = sadd.s32 1, %s18
    %p24 = scmp.ge.s32.totalorder %s23, 2
    %s25 = scalar_select %p24, 0, %s23
    %s26 = sadd.s32 1, %s17
    %s27 = scalar_select %p24, %s26, %s17
    %p28 = scmp.ge.s32.totalorder %s27, 2
    %s29 = scalar_select %p28, 0, %s27
    %s30 = ssub.s32 %s17, %s29
    %s31 = ssub.s32 %s18, %s25
    %s32 = sor.u32 %s30, %s31
    %p33 = scmp.eq.s32.totalorder %s32, 0
    %s35 = sadd.s32 %s34, 1
    %s36 = scalar_select %p33, %s34, %s35
    %p39 = pneg %p33
    %p40 = scmp.eq.s32.totalorder %s10, 3
    %p41 = por %p39, %p40
    %p42 = scmp.ne.s32.totalorder %s34, %s37
    %p43 = scmp.eq.s32.totalorder %s10, 0
    %p44 = por %p42, %p43
    %p45 = scmp.ne.s32.totalorder %s34, %s37
    %p46 = scmp.eq.s32.totalorder %s15, 3
    %p47 = por %p45, %p46
    %p48 = scmp.ne.s32.totalorder %s37, %s38
    %p49 = scmp.eq.s32.totalorder %s15, 0
    %p50 = por %p48, %p49
    %p51 = scmp.ne.s32.totalorder %s37, %s38
    %p52 = scmp.eq.s32.totalorder %s16, 3
    %p53 = por %p51, %p52
    %p55 = scmp.ne.s32.totalorder %s38, %s54
    %p56 = scmp.eq.s32.totalorder %s16, 0
    %p57 = por %p55, %p56
    %s58 = ssub.s32 %s18, %s25
    %p59 = scmp.eq.s32.totalorder %s58, 0
    %s61 = sadd.s32 %s60, 1
    %s62 = scalar_select %p59, %s60, %s61
    %p65 = pneg %p59
    %p66 = scmp.eq.s32.totalorder %s10, 3
    %p67 = por %p65, %p66
    %p68 = scmp.ne.s32.totalorder %s60, %s63
    %p69 = scmp.eq.s32.totalorder %s10, 0
    %p70 = por %p68, %p69
    %p71 = scmp.ne.s32.totalorder %s60, %s63
    %p72 = scmp.eq.s32.totalorder %s15, 3
    %p73 = por %p71, %p72
    %p74 = scmp.ne.s32.totalorder %s63, %s64
    %p75 = scmp.eq.s32.totalorder %s15, 0
    %p76 = por %p74, %p75
    %p77 = scmp.ne.s32.totalorder %s63, %s64
    %p78 = scmp.eq.s32.totalorder %s16, 3
    %p79 = por %p77, %p78
    %p81 = scmp.ne.s32.totalorder %s64, %s80
    %p82 = scmp.eq.s32.totalorder %s16, 0
    %p83 = por %p81, %p82
    %s84 = ssub.s32 %s18, %s25
    %p85 = scmp.eq.s32.totalorder %s84, 0
    %s87 = sadd.s32 %s86, 1
    %s88 = scalar_select %p85, %s86, %s87
    %p91 = pneg %p85
    %p92 = scmp.eq.s32.totalorder %s10, 3
    %p93 = por %p91, %p92
    %p94 = scmp.ne.s32.totalorder %s86, %s89
    %p95 = scmp.eq.s32.totalorder %s10, 0
    %p96 = por %p94, %p95
    %p97 = scmp.ne.s32.totalorder %s86, %s89
    %p98 = scmp.eq.s32.totalorder %s15, 3
    %p99 = por %p97, %p98
    %p100 = scmp.ne.s32.totalorder %s89, %s90
    %p101 = scmp.eq.s32.totalorder %s15, 0
    %p102 = por %p100, %p101
    %p103 = scmp.ne.s32.totalorder %s89, %s90
    %p104 = scmp.eq.s32.totalorder %s16, 3
    %p105 = por %p103, %p104
    %p107 = scmp.ne.s32.totalorder %s90, %s106
    %p108 = scmp.eq.s32.totalorder %s16, 0
    %p109 = por %p107, %p108
    %s110 = ssub.s32 %s17, %s29
    %p111 = scmp.eq.s32.totalorder %s110, 0
    %s113 = sadd.s32 %s112, 1
    %s114 = scalar_select %p111, %s112, %s113
    %p117 = pneg %p111
    %p118 = scmp.eq.s32.totalorder %s10, 3
    %p119 = por %p117, %p118
    %p120 = scmp.ne.s32.totalorder %s112, %s115
    %p121 = scmp.eq.s32.totalorder %s10, 0
    %p122 = por %p120, %p121
    %p123 = scmp.ne.s32.totalorder %s112, %s115
    %p124 = scmp.eq.s32.totalorder %s15, 3
    %p125 = por %p123, %p124
    %p126 = scmp.ne.s32.totalorder %s115, %s116
    %p127 = scmp.eq.s32.totalorder %s15, 0
    %p128 = por %p126, %p127
    %p129 = scmp.ne.s32.totalorder %s115, %s116
    %p130 = scmp.eq.s32.totalorder %s16, 3
    %p131 = por %p129, %p130
    %p133 = scmp.ne.s32.totalorder %s116, %s132
    %p134 = scmp.eq.s32.totalorder %s16, 0
    %p135 = por %p133, %p134
    %s136 = ssub.s32 %s17, %s29
    %s137 = ssub.s32 %s18, %s25
    %s138 = sor.u32 %s136, %s137
    %p139 = scmp.eq.s32.totalorder %s138, 0
    %s141 = sadd.s32 %s140, 1
    %s142 = scalar_select %p139, %s140, %s141
    %p145 = pneg %p139
    %p146 = scmp.eq.s32.totalorder %s10, 3
    %p147 = por %p145, %p146
    %p148 = scmp.ne.s32.totalorder %s140, %s143
    %p149 = scmp.eq.s32.totalorder %s10, 0
    %p150 = por %p148, %p149
    %p151 = scmp.ne.s32.totalorder %s140, %s143
    %p152 = scmp.eq.s32.totalorder %s15, 3
    %p153 = por %p151, %p152
    %p154 = scmp.ne.s32.totalorder %s143, %s144
    %p155 = scmp.eq.s32.totalorder %s15, 0
    %p156 = por %p154, %p155
    %p157 = scmp.ne.s32.totalorder %s143, %s144
    %p158 = scmp.eq.s32.totalorder %s16, 3
    %p159 = por %p157, %p158
    %p161 = scmp.ne.s32.totalorder %s144, %s160
    %p162 = scmp.eq.s32.totalorder %s16, 0
    %p163 = por %p161, %p162
    %p164 = scmp.le.s32.totalorder 1, %s10
    %p165 = scmp.lt.s32.totalorder %s10, 5
    %p166 = pnand %p164, %p165
    %p167 = pneg %p166
    // Predicated region
    $region9: #{mla_forward.1} parent=5 // pred_check
      _
    $region10: #{mla_forward.1} parent=5 // pred_check_branch
      %169 = sbr.rel (%p166) target = $region12
    $region11: #{mla_forward.1} parent=5 // pred_region
      %s170 = ssub.s32 %s10, 1
    $region12: #{mla_forward.1} parent=5 // pred_fallthru
      _
    %p171 = scmp.lt.s32.totalorder %s10, 4
    // Predicated region
    $region13: #{mla_forward.1} parent=5 // pred_check
      %p172 = pneg %p171
    $region14: #{mla_forward.1} parent=5 // pred_check_branch
      %174 = sbr.rel (%p172) target = $region16
    $region15: #{mla_forward.1} parent=5 // pred_region
      // Predicated region
      $region17: #{mla_forward.1} parent=15 // pred_check
        %p175 = pneg %p44
      $region18: #{mla_forward.1} parent=15 // pred_check_branch
        %177 = sbr.rel (%p175) target = $region20
      $region19: #{mla_forward.1} parent=15 // pred_region
        %s178 = smul.u32 2, %s18
        %p179 = scmp.lt.s32.totalorder %s17, 1
        %s180 = scalar_select %p179, %s17, 1
        %p181 = scmp.lt.s32.totalorder %s178, 3
        %s182 = scalar_select %p181, %s178, 3
        %s183 = smul.addr %s180, 4
        %s184 = sadd.s32 %s182, %s183
        %s185 = smul.addr %s184, 8
        %s186 = scalar_lea.vmem %s0, %s185
        %s187 = smul.u32 2, %s18
      $region20: #{mla_forward.1} parent=15 // pred_fallthru
        _
      // Predicated region
      $region21: #{mla_forward.1} parent=15 // pred_check
        %p188 = pneg %p70
      $region22: #{mla_forward.1} parent=15 // pred_check_branch
        %190 = sbr.rel (%p188) target = $region24
      $region23: #{mla_forward.1} parent=15 // pred_region
        %s191 = smul.u32 2, %s18
        %p192 = scmp.lt.s32.totalorder %s191, 3
        %s193 = scalar_select %p192, %s191, 3
        %s194 = smul.addr %s193, 2
        %s195 = smul.addr %s194, 8
        %s196 = scalar_lea.vmem %s1, %s195
        %s197 = smul.u32 2, %s18
      $region24: #{mla_forward.1} parent=15 // pred_fallthru
        _
      // Predicated region
      $region25: #{mla_forward.1} parent=15 // pred_check
        %p198 = pneg %p96
      $region26: #{mla_forward.1} parent=15 // pred_check_branch
        %200 = sbr.rel (%p198) target = $region28
      $region27: #{mla_forward.1} parent=15 // pred_region
        %s201 = smul.u32 2, %s18
        %p202 = scmp.lt.s32.totalorder %s201, 3
        %s203 = scalar_select %p202, %s201, 3
        %s204 = smul.addr %s203, 4
        %s205 = smul.addr %s204, 8
        %s206 = scalar_lea.vmem %s2, %s205
        %s207 = smul.u32 2, %s18
      $region28: #{mla_forward.1} parent=15 // pred_fallthru
        _
      // Predicated region
      $region29: #{mla_forward.1} parent=15 // pred_check
        %p208 = pneg %p122
      $region30: #{mla_forward.1} parent=15 // pred_check_branch
        %210 = sbr.rel (%p208) target = $region32
      $region31: #{mla_forward.1} parent=15 // pred_region
        %p211 = scmp.lt.s32.totalorder %s17, 1
        %s212 = scalar_select %p211, %s17, 1
        %s213 = smul.addr %s212, 8
        %s214 = scalar_lea.vmem %s3, %s213
      $region32: #{mla_forward.1} parent=15 // pred_fallthru
        _
    $region16: #{mla_forward.1} parent=5 // pred_fallthru
      _
    %p215 = scmp.le.s32.totalorder 1, %s10
    %p216 = scmp.lt.s32.totalorder %s10, 5
    %p217 = pnand %p215, %p216
    %p218 = pneg %p217
    // Predicated region
    $region33: #{mla_forward.1} parent=5 // pred_check
      _
    $region34: #{mla_forward.1} parent=5 // pred_check_branch
      %220 = sbr.rel (%p217) target = $region36
    $region35: #{mla_forward.1} parent=5 // pred_region
      %s221 = ssub.s32 %s10, 1
      %s222 = smul.u32 2, %s20
      %p223 = scmp.lt.s32.totalorder %s19, 1
      %s224 = scalar_select %p223, %s19, 1
      %p225 = scmp.lt.s32.totalorder %s222, 3
      %s226 = scalar_select %p225, %s222, 3
      %s227 = smul.addr %s224, 4
      %s228 = sadd.s32 %s226, %s227
      %s229 = smul.addr %s228, 8
      %s230 = scalar_lea.vmem %s0, %s229
      %p231 = pneg %p50
      %p232 = pneg %p47
      %s233 = smul.u32 2, %s20
      %p234 = scmp.lt.s32.totalorder %s233, 3
      %s235 = scalar_select %p234, %s233, 3
      %s236 = smul.addr %s235, 2
      %s237 = smul.addr %s236, 8
      %s238 = scalar_lea.vmem %s1, %s237
      %p239 = pneg %p76
      %p240 = pneg %p73
      %s241 = smul.u32 2, %s20
      %p242 = scmp.lt.s32.totalorder %s241, 3
      %s243 = scalar_select %p242, %s241, 3
      %s244 = smul.addr %s243, 4
      %s245 = smul.addr %s244, 8
      %s246 = scalar_lea.vmem %s2, %s245
      %p247 = pneg %p102
      %p248 = pneg %p99
      %p249 = scmp.lt.s32.totalorder %s19, 1
      %s250 = scalar_select %p249, %s19, 1
      %s251 = smul.addr %s250, 8
      %s252 = scalar_lea.vmem %s3, %s251
      %p253 = pneg %p128
      %p254 = pneg %p125
      %p255 = pneg %p156
      %p256 = pneg %p153
      %s257 = smul.u32 2, %s20
      %p258 = scmp.lt.s32.totalorder %s19, 1
      %s259 = scalar_select %p258, %s19, 1
      %p260 = scmp.lt.s32.totalorder %s257, 3
      %s261 = scalar_select %p260, %s257, 3
      %s262 = smul.addr %s259, 4
      %s263 = sadd.s32 %s261, %s262
      %s264 = smul.addr %s263, 8
      %s265 = scalar_lea.vmem %s4, %s264
      %s266 = smul.u32 2, %s20
      %p267 = scmp.lt.s32.totalorder %s19, 1
      %s268 = scalar_select %p267, %s19, 1
      %p269 = scmp.lt.s32.totalorder %s266, 3
      %s270 = scalar_select %p269, %s266, 3
      %s271 = smul.addr %s268, 4
      %s272 = sadd.s32 %s270, %s271
      %s273 = smul.addr %s272, 8
      %s274 = scalar_lea.vmem %s0, %s273
      %s275 = smul.u32 2, %s20
      %s276 = smul.u32 2, %s20
      %p277 = scmp.lt.s32.totalorder %s276, 3
      %s278 = scalar_select %p277, %s276, 3
      %s279 = smul.addr %s278, 2
      %s280 = smul.addr %s279, 8
      %s281 = scalar_lea.vmem %s1, %s280
      %s282 = smul.u32 2, %s20
      %s283 = smul.u32 2, %s20
      %p284 = scmp.lt.s32.totalorder %s283, 3
      %s285 = scalar_select %p284, %s283, 3
      %s286 = smul.addr %s285, 4
      %s287 = smul.addr %s286, 8
      %s288 = scalar_lea.vmem %s2, %s287
      %s289 = smul.u32 2, %s20
      %p290 = scmp.lt.s32.totalorder %s19, 1
      %s291 = scalar_select %p290, %s19, 1
      %s292 = smul.addr %s291, 8
      %s293 = scalar_lea.vmem %s3, %s292
      %s294 = smul.u32 2, %s20
      %p295 = scmp.lt.s32.totalorder %s19, 1
      %s296 = scalar_select %p295, %s19, 1
      %p297 = scmp.lt.s32.totalorder %s294, 3
      %s298 = scalar_select %p297, %s294, 3
      %s299 = smul.addr %s296, 4
      %s300 = sadd.s32 %s298, %s299
      %s301 = smul.addr %s300, 8
      %s302 = scalar_lea.vmem %s4, %s301
      %s303 = smul.u32 2, %s20
      %v304 = vld [vmem:[%s293] sm:$0xff]
      %v305 = vld [vmem:[%s274] sm:$0xff]
      %v306 = vld [vmem:[%s274 + $0x8] sm:$0xff]
      %v307 = vld [vmem:[%s281] sm:$0xff]
      %v308 = vld [vmem:[%s281 + $0x8] sm:$0xff]
      %v309 = vld [vmem:[%s281 + $0x10] sm:$0xff]
      %v310 = vld [vmem:[%s281 + $0x18] sm:$0xff]
      %vm311 = vcmask 130048
      %v313 = vsel %vm311, %v305, 0
      %315 = vmatprep.subr.mxu0 0.0
      %316 = vmatpush1.msra.mxu0 %v307
      %317 = vmatprep.subr.mxu0 0.0
      %318 = vmatpush1.msra.mxu0 %v308
      %319 = vmatprep.subr.mxu0 0.0
      %320 = vmatpush1.msra.mxu0 0.0
      %321 = vmatprep.subr.mxu0 0.0
      %322 = vmatpush1.msra.mxu0 0.0
      %323 = vmatprep.subr.mxu0 0.0
      %324 = vmatpush1.msra.mxu0 0.0
      %325 = vmatprep.subr.mxu0 0.0
      %326 = vmatpush1.msra.mxu0 0.0
      %327 = vmatprep.subr.mxu0 0.0
      %328 = vmatpush1.msra.mxu0 0.0
      %329 = vmatprep.subr.mxu0 0.0
      %330 = vmatpush1.msra.mxu0 0.0
      %331 = vmatprep.subr.mxu0 0.0
      %332 = vmatpush1.msra.mxu0 0.0
      %333 = vmatprep.subr.mxu0 0.0
      %334 = vmatpush1.msra.mxu0 0.0
      %335 = vmatprep.subr.mxu0 0.0
      %336 = vmatpush1.msra.mxu0 0.0
      %337 = vmatprep.subr.mxu0 0.0
      %338 = vmatpush1.msra.mxu0 0.0
      %339 = vmatprep.subr.mxu0 0.0
      %340 = vmatpush1.msra.mxu0 0.0
      %341 = vmatprep.subr.mxu0 0.0
      %342 = vmatpush1.msra.mxu0 0.0
      %343 = vmatprep.subr.mxu0 0.0
      %344 = vmatpush1.msra.mxu0 0.0
      %345 = vmatprep.subr.mxu0 0.0
      %346 = vmatpush1.msra.mxu0 0.0
      %347 = vmatprep.subr.mxu0 0.0
      %348 = vmatpush1.msra.mxu0 0.0
      %349 = vmatprep.subr.mxu0 0.0
      %350 = vmatpush1.msra.mxu0 0.0
      %351 = vmatprep.subr.mxu0 0.0
      %352 = vmatpush1.msra.mxu0 0.0
      %353 = vmatprep.subr.mxu0 0.0
      %354 = vmatpush1.msra.mxu0 0.0
      %355 = vmatprep.subr.mxu0 0.0
      %356 = vmatpush1.msra.mxu0 0.0
      %357 = vmatprep.subr.mxu0 0.0
      %358 = vmatpush1.msra.mxu0 0.0
      %359 = vmatprep.subr.mxu0 0.0
      %360 = vmatpush1.msra.mxu0 0.0
      %361 = vmatprep.subr.mxu0 0.0
      %362 = vmatpush1.msra.mxu0 0.0
      %363 = vmatprep.subr.mxu0 0.0
      %364 = vmatpush1.msra.mxu0 0.0
      %365 = vmatprep.subr.mxu0 0.0
      %366 = vmatpush1.msra.mxu0 0.0
      %367 = vmatprep.subr.mxu0 0.0
      %368 = vmatpush1.msra.mxu0 0.0
      %369 = vmatprep.subr.mxu0 0.0
      %370 = vmatpush1.msra.mxu0 0.0
      %371 = vmatprep.subr.mxu0 0.0
      %372 = vmatpush1.msra.mxu0 0.0
      %373 = vmatprep.subr.mxu0 0.0
      %374 = vmatpush1.msra.mxu0 0.0
      %375 = vmatprep.subr.mxu0 0.0
      %376 = vmatpush1.msra.mxu0 0.0
      %377 = vmatprep.subr.mxu0 0.0
      %378 = vmatpush1.msra.mxu0 0.0
      %379 = vmatprep.mubr.f32.mxu0 0.0
      %380 = vmatmul.mubr.f32.gmra.mrb[0].mxu0 %v313
      %v381 = vpop.f32.mrb[0].mxu0
      %v382 = vadd.f32 0.0, %v381
      %v383 = vpop.f32.mrb[0].mxu0
      %384 = vdwg.mxu0
      %v386 = vsel %vm311, %v306, 0
      %388 = vmatprep.subr.mxu0 0.0
      %389 = vmatpush1.msra.mxu0 %v309
      %390 = vmatprep.subr.mxu0 0.0
      %391 = vmatpush1.msra.mxu0 %v310
      %392 = vmatprep.subr.mxu0 0.0
      %393 = vmatpush1.msra.mxu0 0.0
      %394 = vmatprep.subr.mxu0 0.0
      %395 = vmatpush1.msra.mxu0 0.0
      %396 = vmatprep.subr.mxu0 0.0
      %397 = vmatpush1.msra.mxu0 0.0
      %398 = vmatprep.subr.mxu0 0.0
      %399 = vmatpush1.msra.mxu0 0.0
      %400 = vmatprep.subr.mxu0 0.0
      %401 = vmatpush1.msra.mxu0 0.0
      %402 = vmatprep.subr.mxu0 0.0
      %403 = vmatpush1.msra.mxu0 0.0
      %404 = vmatprep.subr.mxu0 0.0
      %405 = vmatpush1.msra.mxu0 0.0
      %406 = vmatprep.subr.mxu0 0.0
      %407 = vmatpush1.msra.mxu0 0.0
      %408 = vmatprep.subr.mxu0 0.0
      %409 = vmatpush1.msra.mxu0 0.0
      %410 = vmatprep.subr.mxu0 0.0
      %411 = vmatpush1.msra.mxu0 0.0
      %412 = vmatprep.subr.mxu0 0.0
      %413 = vmatpush1.msra.mxu0 0.0
      %414 = vmatprep.subr.mxu0 0.0
      %415 = vmatpush1.msra.mxu0 0.0
      %416 = vmatprep.subr.mxu0 0.0
      %417 = vmatpush1.msra.mxu0 0.0
      %418 = vmatprep.subr.mxu0 0.0
      %419 = vmatpush1.msra.mxu0 0.0
      %420 = vmatprep.subr.mxu0 0.0
      %421 = vmatpush1.msra.mxu0 0.0
      %422 = vmatprep.subr.mxu0 0.0
      %423 = vmatpush1.msra.mxu0 0.0
      %424 = vmatprep.subr.mxu0 0.0
      %425 = vmatpush1.msra.mxu0 0.0
      %426 = vmatprep.subr.mxu0 0.0
      %427 = vmatpush1.msra.mxu0 0.0
      %428 = vmatprep.subr.mxu0 0.0
      %429 = vmatpush1.msra.mxu0 0.0
      %430 = vmatprep.subr.mxu0 0.0
      %431 = vmatpush1.msra.mxu0 0.0
      %432 = vmatprep.subr.mxu0 0.0
      %433 = vmatpush1.msra.mxu0 0.0
      %434 = vmatprep.subr.mxu0 0.0
      %435 = vmatpush1.msra.mxu0 0.0
      %436 = vmatprep.subr.mxu0 0.0
      %437 = vmatpush1.msra.mxu0 0.0
      %438 = vmatprep.subr.mxu0 0.0
      %439 = vmatpush1.msra.mxu0 0.0
      %440 = vmatprep.subr.mxu0 0.0
      %441 = vmatpush1.msra.mxu0 0.0
      %442 = vmatprep.subr.mxu0 0.0
      %443 = vmatpush1.msra.mxu0 0.0
      %444 = vmatprep.subr.mxu0 0.0
      %445 = vmatpush1.msra.mxu0 0.0
      %446 = vmatprep.subr.mxu0 0.0
      %447 = vmatpush1.msra.mxu0 0.0
      %448 = vmatprep.subr.mxu0 0.0
      %449 = vmatpush1.msra.mxu0 0.0
      %450 = vmatprep.subr.mxu0 0.0
      %451 = vmatpush1.msra.mxu0 0.0
      %452 = vmatprep.mubr.f32.mxu0 0.0
      %453 = vmatmul.mubr.f32.gmra.mrb[0].mxu0 %v386
      %v454 = vpop.f32.mrb[0].mxu0
      %v455 = vadd.f32 0.0, %v454
      %v456 = vpop.f32.mrb[0].mxu0
      %457 = vdwg.mxu0
      %vm458 = vcmask 261120
      %v460 = vsel %vm458, %v382, 0
      %v463 = vsel %vm458, %v455, 0
      %v466 = vsel %vm458, %v304, 0
      %468 = vmatprep.subr.mxu0 0.0
      %469 = vmatpush1.xpose.msra.mxu0 %v466
      %470 = vmatprep.subr.mxu0 0.0
      %471 = vmatpush1.xpose.msra.mxu0 0.0
      %472 = vmatprep.subr.mxu0 0.0
      %473 = vmatpush1.xpose.msra.mxu0 0.0
      %474 = vmatprep.subr.mxu0 0.0
      %475 = vmatpush1.xpose.msra.mxu0 0.0
      %476 = vmatprep.subr.mxu0 0.0
      %477 = vmatpush1.xpose.msra.mxu0 0.0
      %478 = vmatprep.subr.mxu0 0.0
      %479 = vmatpush1.xpose.msra.mxu0 0.0
      %480 = vmatprep.subr.mxu0 0.0
      %481 = vmatpush1.xpose.msra.mxu0 0.0
      %482 = vmatprep.subr.mxu0 0.0
      %483 = vmatpush1.xpose.msra.mxu0 0.0
      %484 = vmatprep.subr.mxu0 0.0
      %485 = vmatpush1.xpose.msra.mxu0 0.0
      %486 = vmatprep.subr.mxu0 0.0
      %487 = vmatpush1.xpose.msra.mxu0 0.0
      %488 = vmatprep.subr.mxu0 0.0
      %489 = vmatpush1.xpose.msra.mxu0 0.0
      %490 = vmatprep.subr.mxu0 0.0
      %491 = vmatpush1.xpose.msra.mxu0 0.0
      %492 = vmatprep.subr.mxu0 0.0
      %493 = vmatpush1.xpose.msra.mxu0 0.0
      %494 = vmatprep.subr.mxu0 0.0
      %495 = vmatpush1.xpose.msra.mxu0 0.0
      %496 = vmatprep.subr.mxu0 0.0
      %497 = vmatpush1.xpose.msra.mxu0 0.0
      %498 = vmatprep.subr.mxu0 0.0
      %499 = vmatpush1.xpose.msra.mxu0 0.0
      %500 = vmatprep.subr.mxu0 0.0
      %501 = vmatpush1.xpose.msra.mxu0 0.0
      %502 = vmatprep.subr.mxu0 0.0
      %503 = vmatpush1.xpose.msra.mxu0 0.0
      %504 = vmatprep.subr.mxu0 0.0
      %505 = vmatpush1.xpose.msra.mxu0 0.0
      %506 = vmatprep.subr.mxu0 0.0
      %507 = vmatpush1.xpose.msra.mxu0 0.0
      %508 = vmatprep.subr.mxu0 0.0
      %509 = vmatpush1.xpose.msra.mxu0 0.0
      %510 = vmatprep.subr.mxu0 0.0
      %511 = vmatpush1.xpose.msra.mxu0 0.0
      %512 = vmatprep.subr.mxu0 0.0
      %513 = vmatpush1.xpose.msra.mxu0 0.0
      %514 = vmatprep.subr.mxu0 0.0
      %515 = vmatpush1.xpose.msra.mxu0 0.0
      %516 = vmatprep.subr.mxu0 0.0
      %517 = vmatpush1.xpose.msra.mxu0 0.0
      %518 = vmatprep.subr.mxu0 0.0
      %519 = vmatpush1.xpose.msra.mxu0 0.0
      %520 = vmatprep.subr.mxu0 0.0
      %521 = vmatpush1.xpose.msra.mxu0 0.0
      %522 = vmatprep.subr.mxu0 0.0
      %523 = vmatpush1.xpose.msra.mxu0 0.0
      %524 = vmatprep.subr.mxu0 0.0
      %525 = vmatpush1.xpose.msra.mxu0 0.0
      %526 = vmatprep.subr.mxu0 0.0
      %527 = vmatpush1.xpose.msra.mxu0 0.0
      %528 = vmatprep.subr.mxu0 0.0
      %529 = vmatpush1.xpose.msra.mxu0 0.0
      %530 = vmatprep.subr.mxu0 0.0
      %531 = vmatpush1.xpose.msra.mxu0 0.0
      %532 = vmatprep.mubr.f32.mxu0 0.0
      %533 = vmatmul.mubr.f32.gmra.mrb[0].mxu0 %v460
      %v534 = vpop.f32.mrb[0].mxu0
      %v535 = vadd.f32 0.0, %v534
      %v536 = vpop.f32.mrb[0].mxu0
      %537 = vmatprep.mubr.f32.mxu0 0.0
      %538 = vmatmul.mubr.f32.gmra.mrb[0].mxu0 %v463
      %v539 = vpop.f32.mrb[0].mxu0
      %v540 = vadd.f32 0.0, %v539
      %v541 = vpop.f32.mrb[0].mxu0
      %542 = vdwg.mxu0
      %vm543 = vcmask 64512
      %v544 = vsel %vm543, %v535, -inf
      %545 = vmax.xlane.f32.xlu0 %v544
      %v546 = vpop.xlane.xlu0 %545
      %v547 = vsel %vm543, %v540, -inf
      %548 = vmax.xlane.f32.xlu0 %v547
      %v549 = vpop.xlane.xlu0 %548
      %v550 = vsub.f32 %v535, %v546
      %v551 = vsub.f32 %v540, %v549
      %v552 = vmul.f32 %v550, 1.442695
      %v553 = vpow.pop %v552
      %v554 = vmul.f32 %v551, 1.442695
      %v555 = vpow.pop %v554
      %v556 = vsel %vm543, %v553, 0.0
      %557 = vadd.xlane.f32.xlu0 %v556
      %v558 = vpop.xlane.xlu0 %557
      %v559 = vsel %vm543, %v555, 0.0
      %560 = vadd.xlane.f32.xlu0 %v559
      %v561 = vpop.xlane.xlu0 %560
      %v562 = vrcp.pop %v558
      %v563 = vmul.f32 %v553, %v562
      %v564 = vrcp.pop %v561
      %v565 = vmul.f32 %v555, %v564
      %v567 = vsel %vm543, %v563, 0
      %v570 = vsel %vm543, %v565, 0
      %572 = vmatprep.subr.mxu0 0.0
      %573 = vmatpush1.msra.mxu0 %v304
      %574 = vmatprep.subr.mxu0 0.0
      %575 = vmatpush1.msra.mxu0 0.0
      %576 = vmatprep.subr.mxu0 0.0
      %577 = vmatpush1.msra.mxu0 0.0
      %578 = vmatprep.subr.mxu0 0.0
      %579 = vmatpush1.msra.mxu0 0.0
      %580 = vmatprep.subr.mxu0 0.0
      %581 = vmatpush1.msra.mxu0 0.0
      %582 = vmatprep.subr.mxu0 0.0
      %583 = vmatpush1.msra.mxu0 0.0
      %584 = vmatprep.subr.mxu0 0.0
      %585 = vmatpush1.msra.mxu0 0.0
      %586 = vmatprep.subr.mxu0 0.0
      %587 = vmatpush1.msra.mxu0 0.0
      %588 = vmatprep.subr.mxu0 0.0
      %589 = vmatpush1.msra.mxu0 0.0
      %590 = vmatprep.subr.mxu0 0.0
      %591 = vmatpush1.msra.mxu0 0.0
      %592 = vmatprep.subr.mxu0 0.0
      %593 = vmatpush1.msra.mxu0 0.0
      %594 = vmatprep.subr.mxu0 0.0
      %595 = vmatpush1.msra.mxu0 0.0
      %596 = vmatprep.subr.mxu0 0.0
      %597 = vmatpush1.msra.mxu0 0.0
      %598 = vmatprep.subr.mxu0 0.0
      %599 = vmatpush1.msra.mxu0 0.0
      %600 = vmatprep.subr.mxu0 0.0
      %601 = vmatpush1.msra.mxu0 0.0
      %602 = vmatprep.subr.mxu0 0.0
      %603 = vmatpush1.msra.mxu0 0.0
      %604 = vmatprep.subr.mxu0 0.0
      %605 = vmatpush1.msra.mxu0 0.0
      %606 = vmatprep.subr.mxu0 0.0
      %607 = vmatpush1.msra.mxu0 0.0
      %608 = vmatprep.subr.mxu0 0.0
      %609 = vmatpush1.msra.mxu0 0.0
      %610 = vmatprep.subr.mxu0 0.0
      %611 = vmatpush1.msra.mxu0 0.0
      %612 = vmatprep.subr.mxu0 0.0
      %613 = vmatpush1.msra.mxu0 0.0
      %614 = vmatprep.subr.mxu0 0.0
      %615 = vmatpush1.msra.mxu0 0.0
      %616 = vmatprep.subr.mxu0 0.0
      %617 = vmatpush1.msra.mxu0 0.0
      %618 = vmatprep.subr.mxu0 0.0
      %619 = vmatpush1.msra.mxu0 0.0
      %620 = vmatprep.subr.mxu0 0.0
      %621 = vmatpush1.msra.mxu0 0.0
      %622 = vmatprep.subr.mxu0 0.0
      %623 = vmatpush1.msra.mxu0 0.0
      %624 = vmatprep.subr.mxu0 0.0
      %625 = vmatpush1.msra.mxu0 0.0
      %626 = vmatprep.subr.mxu0 0.0
      %627 = vmatpush1.msra.mxu0 0.0
      %628 = vmatprep.subr.mxu0 0.0
      %629 = vmatpush1.msra.mxu0 0.0
      %630 = vmatprep.subr.mxu0 0.0
      %631 = vmatpush1.msra.mxu0 0.0
      %632 = vmatprep.subr.mxu0 0.0
      %633 = vmatpush1.msra.mxu0 0.0
      %634 = vmatprep.subr.mxu0 0.0
      %635 = vmatpush1.msra.mxu0 0.0
      %636 = vmatprep.mubr.f32.mxu0 0.0
      %637 = vmatmul.mubr.f32.gmra.mrb[0].mxu0 %v567
      %v638 = vpop.f32.mrb[0].mxu0
      %v639 = vadd.f32 0.0, %v638
      %v640 = vpop.f32.mrb[0].mxu0
      %641 = vmatprep.mubr.f32.mxu0 0.0
      %642 = vmatmul.mubr.f32.gmra.mrb[0].mxu0 %v570
      %v643 = vpop.f32.mrb[0].mxu0
      %v644 = vadd.f32 0.0, %v643
      %v645 = vpop.f32.mrb[0].mxu0
      %646 = vdwg.mxu0
      %v647 = vld [vmem:[%s288] sm:$0xff]
      %v648 = vld [vmem:[%s288 + $0x8] sm:$0xff]
      %v649 = vld [vmem:[%s288 + $0x10] sm:$0xff]
      %v650 = vld [vmem:[%s288 + $0x18] sm:$0xff]
      %v651 = vld [vmem:[%s288 + $0x20] sm:$0xff]
      %v652 = vld [vmem:[%s288 + $0x28] sm:$0xff]
      %v653 = vld [vmem:[%s288 + $0x30] sm:$0xff]
      %v654 = vld [vmem:[%s288 + $0x38] sm:$0xff]
      %v656 = vsel %vm458, %v639, 0
      %658 = vmatprep.subr.mxu0 0.0
      %659 = vmatpush1.msra.mxu0 %v647
      %660 = vmatprep.subr.mxu0 0.0
      %661 = vmatpush1.msra.mxu0 %v648
      %662 = vmatprep.subr.mxu0 0.0
      %663 = vmatpush1.msra.mxu0 %v649
      %664 = vmatprep.subr.mxu0 0.0
      %665 = vmatpush1.msra.mxu0 %v650
      %666 = vmatprep.subr.mxu0 0.0
      %667 = vmatpush1.msra.mxu0 0.0
      %668 = vmatprep.subr.mxu0 0.0
      %669 = vmatpush1.msra.mxu0 0.0
      %670 = vmatprep.subr.mxu0 0.0
      %671 = vmatpush1.msra.mxu0 0.0
      %672 = vmatprep.subr.mxu0 0.0
      %673 = vmatpush1.msra.mxu0 0.0
      %674 = vmatprep.subr.mxu0 0.0
      %675 = vmatpush1.msra.mxu0 0.0
      %676 = vmatprep.subr.mxu0 0.0
      %677 = vmatpush1.msra.mxu0 0.0
      %678 = vmatprep.subr.mxu0 0.0
      %679 = vmatpush1.msra.mxu0 0.0
      %680 = vmatprep.subr.mxu0 0.0
      %681 = vmatpush1.msra.mxu0 0.0
      %682 = vmatprep.subr.mxu0 0.0
      %683 = vmatpush1.msra.mxu0 0.0
      %684 = vmatprep.subr.mxu0 0.0
      %685 = vmatpush1.msra.mxu0 0.0
      %686 = vmatprep.subr.mxu0 0.0
      %687 = vmatpush1.msra.mxu0 0.0
      %688 = vmatprep.subr.mxu0 0.0
      %689 = vmatpush1.msra.mxu0 0.0
      %690 = vmatprep.subr.mxu0 0.0
      %691 = vmatpush1.msra.mxu0 0.0
      %692 = vmatprep.subr.mxu0 0.0
      %693 = vmatpush1.msra.mxu0 0.0
      %694 = vmatprep.subr.mxu0 0.0
      %695 = vmatpush1.msra.mxu0 0.0
      %696 = vmatprep.subr.mxu0 0.0
      %697 = vmatpush1.msra.mxu0 0.0
      %698 = vmatprep.subr.mxu0 0.0
      %699 = vmatpush1.msra.mxu0 0.0
      %700 = vmatprep.subr.mxu0 0.0
      %701 = vmatpush1.msra.mxu0 0.0
      %702 = vmatprep.subr.mxu0 0.0
      %703 = vmatpush1.msra.mxu0 0.0
      %704 = vmatprep.subr.mxu0 0.0
      %705 = vmatpush1.msra.mxu0 0.0
      %706 = vmatprep.subr.mxu0 0.0
      %707 = vmatpush1.msra.mxu0 0.0
      %708 = vmatprep.subr.mxu0 0.0
      %709 = vmatpush1.msra.mxu0 0.0
      %710 = vmatprep.subr.mxu0 0.0
      %711 = vmatpush1.msra.mxu0 0.0
      %712 = vmatprep.subr.mxu0 0.0
      %713 = vmatpush1.msra.mxu0 0.0
      %714 = vmatprep.subr.mxu0 0.0
      %715 = vmatpush1.msra.mxu0 0.0
      %716 = vmatprep.subr.mxu0 0.0
      %717 = vmatpush1.msra.mxu0 0.0
      %718 = vmatprep.subr.mxu0 0.0
      %719 = vmatpush1.msra.mxu0 0.0
      %720 = vmatprep.subr.mxu0 0.0
      %721 = vmatpush1.msra.mxu0 0.0
      %722 = vmatprep.mubr.f32.mxu0 0.0
      %723 = vmatmul.mubr.f32.gmra.mrb[0].mxu0 %v656
      %v724 = vpop.f32.mrb[0].mxu0
      %v725 = vadd.f32 0.0, %v724
      %v726 = vpop.f32.mrb[0].mxu0
      %727 = vdwg.mxu0
      %v729 = vsel %vm458, %v644, 0
      %731 = vmatprep.subr.mxu0 0.0
      %732 = vmatpush1.msra.mxu0 %v651
      %733 = vmatprep.subr.mxu0 0.0
      %734 = vmatpush1.msra.mxu0 %v652
      %735 = vmatprep.subr.mxu0 0.0
      %736 = vmatpush1.msra.mxu0 %v653
      %737 = vmatprep.subr.mxu0 0.0
      %738 = vmatpush1.msra.mxu0 %v654
      %739 = vmatprep.subr.mxu0 0.0
      %740 = vmatpush1.msra.mxu0 0.0
      %741 = vmatprep.subr.mxu0 0.0
      %742 = vmatpush1.msra.mxu0 0.0
      %743 = vmatprep.subr.mxu0 0.0
      %744 = vmatpush1.msra.mxu0 0.0
      %745 = vmatprep.subr.mxu0 0.0
      %746 = vmatpush1.msra.mxu0 0.0
      %747 = vmatprep.subr.mxu0 0.0
      %748 = vmatpush1.msra.mxu0 0.0
      %749 = vmatprep.subr.mxu0 0.0
      %750 = vmatpush1.msra.mxu0 0.0
      %751 = vmatprep.subr.mxu0 0.0
      %752 = vmatpush1.msra.mxu0 0.0
      %753 = vmatprep.subr.mxu0 0.0
      %754 = vmatpush1.msra.mxu0 0.0
      %755 = vmatprep.subr.mxu0 0.0
      %756 = vmatpush1.msra.mxu0 0.0
      %757 = vmatprep.subr.mxu0 0.0
      %758 = vmatpush1.msra.mxu0 0.0
      %759 = vmatprep.subr.mxu0 0.0
      %760 = vmatpush1.msra.mxu0 0.0
      %761 = vmatprep.subr.mxu0 0.0
      %762 = vmatpush1.msra.mxu0 0.0
      %763 = vmatprep.subr.mxu0 0.0
      %764 = vmatpush1.msra.mxu0 0.0
      %765 = vmatprep.subr.mxu0 0.0
      %766 = vmatpush1.msra.mxu0 0.0
      %767 = vmatprep.subr.mxu0 0.0
      %768 = vmatpush1.msra.mxu0 0.0
      %769 = vmatprep.subr.mxu0 0.0
      %770 = vmatpush1.msra.mxu0 0.0
      %771 = vmatprep.subr.mxu0 0.0
      %772 = vmatpush1.msra.mxu0 0.0
      %773 = vmatprep.subr.mxu0 0.0
      %774 = vmatpush1.msra.mxu0 0.0
      %775 = vmatprep.subr.mxu0 0.0
      %776 = vmatpush1.msra.mxu0 0.0
      %777 = vmatprep.subr.mxu0 0.0
      %778 = vmatpush1.msra.mxu0 0.0
      %779 = vmatprep.subr.mxu0 0.0
      %780 = vmatpush1.msra.mxu0 0.0
      %781 = vmatprep.subr.mxu0 0.0
      %782 = vmatpush1.msra.mxu0 0.0
      %783 = vmatprep.subr.mxu0 0.0
      %784 = vmatpush1.msra.mxu0 0.0
      %785 = vmatprep.subr.mxu0 0.0
      %786 = vmatpush1.msra.mxu0 0.0
      %787 = vmatprep.subr.mxu0 0.0
      %788 = vmatpush1.msra.mxu0 0.0
      %789 = vmatprep.subr.mxu0 0.0
      %790 = vmatpush1.msra.mxu0 0.0
      %791 = vmatprep.subr.mxu0 0.0
      %792 = vmatpush1.msra.mxu0 0.0
      %793 = vmatprep.subr.mxu0 0.0
      %794 = vmatpush1.msra.mxu0 0.0
      %795 = vmatprep.mubr.f32.mxu0 0.0
      %796 = vmatmul.mubr.f32.gmra.mrb[0].mxu0 %v729
      %v797 = vpop.f32.mrb[0].mxu0
      %v798 = vadd.f32 0.0, %v797
      %v799 = vpop.f32.mrb[0].mxu0
      %800 = vdwg.mxu0
      %801 = vst.msk [vmem:[%s302] sm:$0xff] %vm311, %v725
      %802 = vst.msk [vmem:[%s302 + $0x8] sm:$0xff] %vm311, %v798
      %s803 = smul.u32 2, %s20
      %p804 = scmp.lt.s32.totalorder %s19, 1
      %s805 = scalar_select %p804, %s19, 1
      %p806 = scmp.lt.s32.totalorder %s803, 3
      %s807 = scalar_select %p806, %s803, 3
      %s808 = smul.addr %s805, 4
      %s809 = sadd.s32 %s807, %s808
      %s810 = smul.addr %s809, 8
      %s811 = scalar_lea.vmem %s4, %s810
      // Predicated region
      $region37: #{mla_forward.1} parent=35 // pred_check
        %p812 = pneg %p153
      $region38: #{mla_forward.1} parent=35 // pred_check_branch
        %814 = sbr.rel (%p812) target = $region40
      $region39: #{mla_forward.1} parent=35 // pred_region
        %s815 = smul.u32 2, %s20
      $region40: #{mla_forward.1} parent=35 // pred_fallthru
        _
    $region36: #{mla_forward.1} parent=5 // pred_fallthru
      _
    %p816 = scmp.le.s32.totalorder 2, %s10
    // Predicated region
    $region41: #{mla_forward.1} parent=5 // pred_check
      %p817 = pneg %p816
    $region42: #{mla_forward.1} parent=5 // pred_check_branch
      %819 = sbr.rel (%p817) target = $region44
    $region43: #{mla_forward.1} parent=5 // pred_region
      %s820 = ssub.s32 %s10, 2
      // Predicated region
      $region45: #{mla_forward.1} parent=43 // pred_check
        %p821 = pneg %p159
      $region46: #{mla_forward.1} parent=43 // pred_check_branch
        %823 = sbr.rel (%p821) target = $region48
      $region47: #{mla_forward.1} parent=43 // pred_region
        %s824 = smul.u32 2, %s22
        %p825 = scmp.lt.s32.totalorder %s21, 1
        %s826 = scalar_select %p825, %s21, 1
        %p827 = scmp.lt.s32.totalorder %s824, 3
        %s828 = scalar_select %p827, %s824, 3
        %s829 = smul.addr %s826, 4
        %s830 = sadd.s32 %s828, %s829
        %s831 = smul.addr %s830, 8
        %s832 = scalar_lea.vmem %s4, %s831
      $region48: #{mla_forward.1} parent=43 // pred_fallthru
        _
    $region44: #{mla_forward.1} parent=5 // pred_fallthru
      _
  $region6: #{mla_forward.1} parent=0 // loop_footer
    %s14 = sadd.s32 1, %s10
  $region7: #{mla_forward.1} parent=0 // loop_footer_branch
    %9 = sbr.rel target = $region3
  $region8: #{mla_forward.1} parent=0 // loop_exit
    _

</llo_original>
